<compile_context>
chip_gen: v7x
topology: tpu7x:2x2x1
jax: 0.10.0
libtpu: 0.0.40
codegen_flags: <defaults>
</compile_context>

<pallas_src>
import functools

import jax
import jax.numpy as jnp
from jax.experimental import pallas as pl
from jax.experimental.pallas import tpu as pltpu


def _layernorm(v, gamma, beta, eps):
    # Two-pass form (matches torch.nn.LayerNorm numerics), all in f32.
    mean = jnp.mean(v, axis=-1, keepdims=True)
    centered = v - mean
    var = jnp.mean(centered * centered, axis=-1, keepdims=True)
    return centered * jax.lax.rsqrt(var + eps) * gamma + beta


def _sigmoid_via_tanh(x):
    # sigmoid(x) == 0.5*tanh(0.5*x) + 0.5 : one EUP op instead of exp + divide.
    return 0.5 * jnp.tanh(0.5 * x) + 0.5


def norm_gru_kernel(eps, x_ref, h_ref, wih_ref, whh_ref, ln_ref, out_ref):
    mm_dtype = wih_ref.dtype                 # bf16 matmul operands
    x_mm = x_ref[...].astype(mm_dtype)       # (TB, I)
    h_raw = h_ref[...]                       # read h once
    h_mm = h_raw.astype(mm_dtype)            # (TB, H) bf16 for the matmul
    h_f32 = h_raw.astype(jnp.float32)        # f32 copy only for the blend

    # Fused gate matmuls: one (TB,I)@(I,3H) and one (TB,H)@(H,3H), f32 accum.
    gi = jnp.dot(x_mm, wih_ref[...], preferred_element_type=jnp.float32)
    gh = jnp.dot(h_mm, whh_ref[...], preferred_element_type=jnp.float32)

    H = ln_ref.shape[-1]
    reset_i, update_i, newval_i = gi[:, :H], gi[:, H:2 * H], gi[:, 2 * H:]
    reset_h, update_h, newval_h = gh[:, :H], gh[:, H:2 * H], gh[:, 2 * H:]

    ln = ln_ref[...].astype(jnp.float32)     # (6, H): gr, br, gu, bu, gn, bn
    reset = _sigmoid_via_tanh(_layernorm(reset_i + reset_h, ln[0:1], ln[1:2], eps))
    update = _sigmoid_via_tanh(_layernorm(update_i + update_h, ln[2:3], ln[3:4], eps))
    newval = jnp.tanh(
        _layernorm(newval_i + reset * newval_h, ln[4:5], ln[5:6], eps))

    out_ref[...] = (update * newval + (1.0 - update) * h_f32).astype(out_ref.dtype)


def prepare_norm_gru_params(w_ih, w_hh,
                            g_reset, b_reset, g_update, b_update,
                            g_newval, b_newval, *, mm_dtype=jnp.bfloat16):
    """One-time parameter repack (call at setup, NOT per GRU step).

    w_ih: (3H, I), w_hh: (3H, H) in PyTorch nn.Linear layout (out = x @ W.T).
    Returns:
      w_ih_f (I, 3H), w_hh_f (H, 3H) in mm_dtype (fused x@W layout, gate
      column order [reset | update | newval]), ln_params (6, H) f32 rows
      [g_r, b_r, g_u, b_u, g_n, b_n].
    """
    w_ih_f = jnp.asarray(w_ih, jnp.float32).T.astype(mm_dtype)
    w_hh_f = jnp.asarray(w_hh, jnp.float32).T.astype(mm_dtype)
    ln_params = jnp.stack([
        jnp.asarray(g_reset, jnp.float32), jnp.asarray(b_reset, jnp.float32),
        jnp.asarray(g_update, jnp.float32), jnp.asarray(b_update, jnp.float32),
        jnp.asarray(g_newval, jnp.float32), jnp.asarray(b_newval, jnp.float32),
    ], axis=0)
    return w_ih_f, w_hh_f, ln_params


def _device_vmem_bytes():
    try:
        return int(pltpu.get_tpu_info().vmem_capacity_bytes)
    except Exception:
        return 64 << 20          # conservative: v7x per-TensorCore VMEM


def _round_up(x, m):
    return ((x + m - 1) // m) * m


def _vmem_estimate(tb, inp, hidden, weight_bytes):
    act_in = 2 * 4 * tb * (inp + hidden)   # x + h tiles, double-buffered, f32
    act_out = 2 * 4 * tb * hidden          # output tile, double-buffered
    interm = 4 * tb * hidden * 14          # gi/gh (2*3H) + LN/gate/blend temporaries
    return weight_bytes + act_in + act_out + interm + (1 << 20)


def _pick_batch_tile(batch, target, inp, hidden, weight_bytes, budget):
    if batch <= 8:
        return batch                       # single small tile, no padding needed
    tb = min(target, batch)
    if batch >= 16:
        # Ensure >= 2 grid steps so "parallel" actually shards v7x's 2 TCs.
        tb = min(tb, _round_up(batch, 8) // 2)
    tb = max(8, (tb // 8) * 8)             # sublane-aligned tiles
    while tb > 8 and _vmem_estimate(tb, inp, hidden, weight_bytes) > budget:
        tb = max(8, ((tb // 2) // 8) * 8)
    return tb


def norm_gru_cell(x, h, w_ih_f, w_hh_f, ln_params, *, eps=1e-3,
                  batch_tile=256, donate_state=False):
    """x: (B, I); h: (B, H); weights/ln from prepare_norm_gru_params."""
    B, I = x.shape
    Bh, H = h.shape
    assert Bh == B
    assert w_ih_f.shape == (I, 3 * H) and w_hh_f.shape == (H, 3 * H)
    assert ln_params.shape == (6, H)

    weight_bytes = (w_ih_f.size * w_ih_f.dtype.itemsize
                    + w_hh_f.size * w_hh_f.dtype.itemsize
                    + ln_params.size * ln_params.dtype.itemsize)
    vmem_cap = _device_vmem_bytes()
    budget = vmem_cap - (8 << 20)          # headroom for Mosaic internals
    if _vmem_estimate(8, I, H, weight_bytes) > budget:
        # TODO(synk): add a gate/contraction-tiled fallback for H large enough
        # that the fused resident weights overflow per-core VMEM (v7x, H~2K).
        raise ValueError("NormGRUCell weights do not fit resident in VMEM; "
                         "tiled-weight fallback not implemented.")

    tb = _pick_batch_tile(B, batch_tile, I, H, weight_bytes, budget)
    grid_b = -(-B // tb)                   # cdiv
    B_pad = grid_b * tb
    x_p, h_p = x, h
    if B_pad != B:                         # zero-pad ragged batch, sliced back below
        x_p = jnp.pad(x, ((0, B_pad - B), (0, 0)))
        h_p = jnp.pad(h, ((0, B_pad - B), (0, 0)))

    vmem_limit = int(min(budget,
                         max(32 << 20, _vmem_estimate(tb, I, H, weight_bytes))))

    kernel = functools.partial(norm_gru_kernel, eps)
    io_aliases = {1: 0} if (donate_state and B_pad == B) else {}

    out = pl.pallas_call(
        kernel,
        out_shape=jax.ShapeDtypeStruct((B_pad, H), h.dtype),
        grid=(grid_b,),
        in_specs=[
            pl.BlockSpec((tb, I), lambda i: (i, 0)),               # x   (pipelined)
            pl.BlockSpec((tb, H), lambda i: (i, 0)),               # h   (pipelined)
            pl.BlockSpec((I, 3 * H), lambda i: (0, 0),
                         pipeline_mode=pl.Buffered(1)),            # W_ih (resident, 1-buf)
            pl.BlockSpec((H, 3 * H), lambda i: (0, 0),
                         pipeline_mode=pl.Buffered(1)),            # W_hh (resident, 1-buf)
            pl.BlockSpec((6, H), lambda i: (0, 0),
                         pipeline_mode=pl.Buffered(1)),            # LN gamma/beta
        ],
        out_specs=pl.BlockSpec((tb, H), lambda i: (i, 0)),
        compiler_params=pltpu.CompilerParams(
            dimension_semantics=("parallel",),
            vmem_limit_bytes=vmem_limit),
        input_output_aliases=io_aliases,
    )(x_p, h_p, w_ih_f, w_hh_f, ln_params)

    return out if B_pad == B else out[:B]


def _reference(x, h, w_ih, w_hh, gr, br, gu, bu, gn, bn, eps=1e-3,
               mm_dtype=jnp.bfloat16):
    # PyTorch NormGRUCell semantics, with the same bf16 matmul operands the
    # kernel uses (f32 accumulation), so tolerances stay tight.
    gi = jnp.dot(x.astype(mm_dtype),
                 jnp.asarray(w_ih, jnp.float32).T.astype(mm_dtype),
                 preferred_element_type=jnp.float32)
    gh = jnp.dot(h.astype(mm_dtype),
                 jnp.asarray(w_hh, jnp.float32).T.astype(mm_dtype),
                 preferred_element_type=jnp.float32)
    H = h.shape[1]
    ri, ui, ni = gi[:, :H], gi[:, H:2 * H], gi[:, 2 * H:]
    rh, uh, nh = gh[:, :H], gh[:, H:2 * H], gh[:, 2 * H:]

    def ln(v, g, b):                       # two-pass, torch.nn.LayerNorm semantics
        m = v.mean(-1, keepdims=True)
        var = ((v - m) ** 2).mean(-1, keepdims=True)
        return (v - m) / jnp.sqrt(var + eps) * g + b

    reset = jax.nn.sigmoid(ln(ri + rh, gr, br))
    update = jax.nn.sigmoid(ln(ui + uh, gu, bu))
    newval = jnp.tanh(ln(ni + reset * nh, gn, bn))
    return update * newval + (1.0 - update) * h


if __name__ == "__main__":
    B, I, H = 16, 16, 32   # small demo shapes; tile=8 -> 2-step grid

    key = jax.random.PRNGKey(0)
    ks = jax.random.split(key, 6)

    x = jax.random.normal(ks[0], (B, I), jnp.float32)
    h = jax.random.normal(ks[1], (B, H), jnp.float32)
    w_ih = jax.random.uniform(ks[2], (3 * H, I), jnp.float32,
                              -1.0 / jnp.sqrt(I), 1.0 / jnp.sqrt(I))
    w_hh = jax.random.uniform(ks[3], (3 * H, H), jnp.float32,
                              -1.0 / jnp.sqrt(H), 1.0 / jnp.sqrt(H))
    g_reset = 1.0 + 0.01 * jax.random.normal(ks[4], (H,), jnp.float32)
    b_reset = 0.01 * jax.random.normal(ks[5], (H,), jnp.float32)
    g_update = jnp.ones((H,), jnp.float32)
    b_update = jnp.zeros((H,), jnp.float32)
    g_newval = jnp.ones((H,), jnp.float32)
    b_newval = jnp.zeros((H,), jnp.float32)

    # One-time repack (transpose + bf16 cast + LN packing) outside the hot path.
    w_ih_f, w_hh_f, ln_params = prepare_norm_gru_params(
        w_ih, w_hh, g_reset, b_reset, g_update, b_update, g_newval, b_newval)

    out = norm_gru_cell(x, h, w_ih_f, w_hh_f, ln_params)
    out = jax.block_until_ready(out)

    ref = _reference(x, h, w_ih, w_hh,
                     g_reset, b_reset, g_update, b_update, g_newval, b_newval)
    assert out.shape == (B, H)
    assert jnp.allclose(out, ref, atol=2e-4, rtol=2e-4), "mismatch vs reference"

    print("KERNEL_OK")
</pallas_src>

<mosaic_0001>
module attributes {stable_mosaic.version = 11 : i64} {
  func.func @norm_gru_kernel(%arg0: i32, %arg1: memref<8x16xf32, #tpu.memory_space<vmem>>, %arg2: memref<8x32xf32, #tpu.memory_space<vmem>>, %arg3: memref<16x96xbf16, #tpu.memory_space<vmem>>, %arg4: memref<32x96xbf16, #tpu.memory_space<vmem>>, %arg5: memref<6x32xf32, #tpu.memory_space<vmem>>, %arg6: memref<8x32xf32, #tpu.memory_space<vmem>>) attributes {dimension_semantics = [#tpu.dimension_semantics<parallel>], iteration_bounds = array<i64: 2>, scalar_prefetch = 0 : i64, scratch_operands = 0 : i64, tpu.core_type = #tpu.core_type<tc>, window_params = [{transform_indices = @transform_0, window_bounds = array<i64: 8, 16>}, {transform_indices = @transform_1, window_bounds = array<i64: 8, 32>}, {pipeline_mode = #tpu.pipeline_mode<synchronous>, transform_indices = @transform_2, window_bounds = array<i64: 16, 96>}, {pipeline_mode = #tpu.pipeline_mode<synchronous>, transform_indices = @transform_3, window_bounds = array<i64: 32, 96>}, {pipeline_mode = #tpu.pipeline_mode<synchronous>, transform_indices = @transform_4, window_bounds = array<i64: 6, 32>}, {transform_indices = @transform_5, window_bounds = array<i64: 8, 32>}]} {
    %c0 = arith.constant 0 : index
    %c0_0 = arith.constant 0 : index
    %0 = vector.load %arg1[%c0, %c0_0] : memref<8x16xf32, #tpu.memory_space<vmem>>, vector<8x16xf32>
    %1 = arith.truncf %0 : vector<8x16xf32> to vector<8x16xbf16>
    %c0_1 = arith.constant 0 : index
    %c0_2 = arith.constant 0 : index
    %2 = vector.load %arg2[%c0_1, %c0_2] : memref<8x32xf32, #tpu.memory_space<vmem>>, vector<8x32xf32>
    %3 = arith.truncf %2 : vector<8x32xf32> to vector<8x32xbf16>
    %c0_3 = arith.constant 0 : index
    %c0_4 = arith.constant 0 : index
    %4 = vector.load %arg3[%c0_3, %c0_4] : memref<16x96xbf16, #tpu.memory_space<vmem>>, vector<16x96xbf16>
    %cst = arith.constant dense<0.000000e+00> : vector<8x96xf32>
    %5 = tpu.matmul %1, %4, %cst {dimension_numbers = #tpu.dot_dimension_numbers<[1], [0], [0], [1], [0, 0, 1, 1], [], []>} : vector<8x16xbf16>, vector<16x96xbf16>, vector<8x96xf32> -> vector<8x96xf32>
    %c0_5 = arith.constant 0 : index
    %c0_6 = arith.constant 0 : index
    %6 = vector.load %arg4[%c0_5, %c0_6] : memref<32x96xbf16, #tpu.memory_space<vmem>>, vector<32x96xbf16>
    %cst_7 = arith.constant dense<0.000000e+00> : vector<8x96xf32>
    %7 = tpu.matmul %3, %6, %cst_7 {dimension_numbers = #tpu.dot_dimension_numbers<[1], [0], [0], [1], [0, 0, 1, 1], [], []>} : vector<8x32xbf16>, vector<32x96xbf16>, vector<8x96xf32> -> vector<8x96xf32>
    %8 = vector.extract_strided_slice %5 {offsets = [0, 0], sizes = [8, 32], strides = [1, 1]} : vector<8x96xf32> to vector<8x32xf32>
    %9 = vector.extract_strided_slice %5 {offsets = [0, 32], sizes = [8, 32], strides = [1, 1]} : vector<8x96xf32> to vector<8x32xf32>
    %10 = vector.extract_strided_slice %5 {offsets = [0, 64], sizes = [8, 32], strides = [1, 1]} : vector<8x96xf32> to vector<8x32xf32>
    %11 = vector.extract_strided_slice %7 {offsets = [0, 0], sizes = [8, 32], strides = [1, 1]} : vector<8x96xf32> to vector<8x32xf32>
    %12 = vector.extract_strided_slice %7 {offsets = [0, 32], sizes = [8, 32], strides = [1, 1]} : vector<8x96xf32> to vector<8x32xf32>
    %13 = vector.extract_strided_slice %7 {offsets = [0, 64], sizes = [8, 32], strides = [1, 1]} : vector<8x96xf32> to vector<8x32xf32>
    %c0_8 = arith.constant 0 : index
    %c0_9 = arith.constant 0 : index
    %14 = vector.load %arg5[%c0_8, %c0_9] : memref<6x32xf32, #tpu.memory_space<vmem>>, vector<6x32xf32>
    %15 = arith.addf %8, %11 : vector<8x32xf32>
    %16 = vector.extract_strided_slice %14 {offsets = [0, 0], sizes = [1, 32], strides = [1, 1]} : vector<6x32xf32> to vector<1x32xf32>
    %17 = vector.extract_strided_slice %14 {offsets = [1, 0], sizes = [1, 32], strides = [1, 1]} : vector<6x32xf32> to vector<1x32xf32>
    %cst_10 = arith.constant dense<0.000000e+00> : vector<8xf32>
    %18 = vector.multi_reduction <add>, %15, %cst_10 [1] : vector<8x32xf32> to vector<8xf32>
    %19 = vector.shape_cast %18 : vector<8xf32> to vector<8x1xf32>
    %cst_11 = arith.constant 3.200000e+01 : f32
    %20 = vector.broadcast %cst_11 : f32 to vector<8x1xf32>
    %21 = arith.divf %19, %20 : vector<8x1xf32>
    %22 = vector.broadcast %21 : vector<8x1xf32> to vector<8x32xf32>
    %23 = arith.subf %15, %22 : vector<8x32xf32>
    %24 = arith.mulf %23, %23 : vector<8x32xf32>
    %cst_12 = arith.constant dense<0.000000e+00> : vector<8xf32>
    %25 = vector.multi_reduction <add>, %24, %cst_12 [1] : vector<8x32xf32> to vector<8xf32>
    %26 = vector.shape_cast %25 : vector<8xf32> to vector<8x1xf32>
    %cst_13 = arith.constant 3.200000e+01 : f32
    %27 = vector.broadcast %cst_13 : f32 to vector<8x1xf32>
    %28 = arith.divf %26, %27 : vector<8x1xf32>
    %cst_14 = arith.constant 1.000000e-03 : f32
    %29 = vector.broadcast %cst_14 : f32 to vector<8x1xf32>
    %30 = arith.addf %28, %29 : vector<8x1xf32>
    %31 = math.rsqrt %30 : vector<8x1xf32>
    %32 = vector.broadcast %31 : vector<8x1xf32> to vector<8x32xf32>
    %33 = arith.mulf %23, %32 : vector<8x32xf32>
    %34 = vector.broadcast %16 : vector<1x32xf32> to vector<8x32xf32>
    %35 = arith.mulf %33, %34 : vector<8x32xf32>
    %36 = vector.broadcast %17 : vector<1x32xf32> to vector<8x32xf32>
    %37 = arith.addf %35, %36 : vector<8x32xf32>
    %cst_15 = arith.constant 5.000000e-01 : f32
    %38 = vector.broadcast %cst_15 : f32 to vector<8x32xf32>
    %39 = arith.mulf %38, %37 : vector<8x32xf32>
    %40 = math.tanh %39 : vector<8x32xf32>
    %cst_16 = arith.constant 5.000000e-01 : f32
    %41 = vector.broadcast %cst_16 : f32 to vector<8x32xf32>
    %42 = arith.mulf %41, %40 : vector<8x32xf32>
    %cst_17 = arith.constant 5.000000e-01 : f32
    %43 = vector.broadcast %cst_17 : f32 to vector<8x32xf32>
    %44 = arith.addf %42, %43 : vector<8x32xf32>
    %45 = arith.addf %9, %12 : vector<8x32xf32>
    %46 = vector.extract_strided_slice %14 {offsets = [2, 0], sizes = [1, 32], strides = [1, 1]} : vector<6x32xf32> to vector<1x32xf32>
    %47 = vector.extract_strided_slice %14 {offsets = [3, 0], sizes = [1, 32], strides = [1, 1]} : vector<6x32xf32> to vector<1x32xf32>
    %cst_18 = arith.constant dense<0.000000e+00> : vector<8xf32>
    %48 = vector.multi_reduction <add>, %45, %cst_18 [1] : vector<8x32xf32> to vector<8xf32>
    %49 = vector.shape_cast %48 : vector<8xf32> to vector<8x1xf32>
    %cst_19 = arith.constant 3.200000e+01 : f32
    %50 = vector.broadcast %cst_19 : f32 to vector<8x1xf32>
    %51 = arith.divf %49, %50 : vector<8x1xf32>
    %52 = vector.broadcast %51 : vector<8x1xf32> to vector<8x32xf32>
    %53 = arith.subf %45, %52 : vector<8x32xf32>
    %54 = arith.mulf %53, %53 : vector<8x32xf32>
    %cst_20 = arith.constant dense<0.000000e+00> : vector<8xf32>
    %55 = vector.multi_reduction <add>, %54, %cst_20 [1] : vector<8x32xf32> to vector<8xf32>
    %56 = vector.shape_cast %55 : vector<8xf32> to vector<8x1xf32>
    %cst_21 = arith.constant 3.200000e+01 : f32
    %57 = vector.broadcast %cst_21 : f32 to vector<8x1xf32>
    %58 = arith.divf %56, %57 : vector<8x1xf32>
    %cst_22 = arith.constant 1.000000e-03 : f32
    %59 = vector.broadcast %cst_22 : f32 to vector<8x1xf32>
    %60 = arith.addf %58, %59 : vector<8x1xf32>
    %61 = math.rsqrt %60 : vector<8x1xf32>
    %62 = vector.broadcast %61 : vector<8x1xf32> to vector<8x32xf32>
    %63 = arith.mulf %53, %62 : vector<8x32xf32>
    %64 = vector.broadcast %46 : vector<1x32xf32> to vector<8x32xf32>
    %65 = arith.mulf %63, %64 : vector<8x32xf32>
    %66 = vector.broadcast %47 : vector<1x32xf32> to vector<8x32xf32>
    %67 = arith.addf %65, %66 : vector<8x32xf32>
    %cst_23 = arith.constant 5.000000e-01 : f32
    %68 = vector.broadcast %cst_23 : f32 to vector<8x32xf32>
    %69 = arith.mulf %68, %67 : vector<8x32xf32>
    %70 = math.tanh %69 : vector<8x32xf32>
    %cst_24 = arith.constant 5.000000e-01 : f32
    %71 = vector.broadcast %cst_24 : f32 to vector<8x32xf32>
    %72 = arith.mulf %71, %70 : vector<8x32xf32>
    %cst_25 = arith.constant 5.000000e-01 : f32
    %73 = vector.broadcast %cst_25 : f32 to vector<8x32xf32>
    %74 = arith.addf %72, %73 : vector<8x32xf32>
    %75 = arith.mulf %44, %13 : vector<8x32xf32>
    %76 = arith.addf %10, %75 : vector<8x32xf32>
    %77 = vector.extract_strided_slice %14 {offsets = [4, 0], sizes = [1, 32], strides = [1, 1]} : vector<6x32xf32> to vector<1x32xf32>
    %78 = vector.extract_strided_slice %14 {offsets = [5, 0], sizes = [1, 32], strides = [1, 1]} : vector<6x32xf32> to vector<1x32xf32>
    %cst_26 = arith.constant dense<0.000000e+00> : vector<8xf32>
    %79 = vector.multi_reduction <add>, %76, %cst_26 [1] : vector<8x32xf32> to vector<8xf32>
    %80 = vector.shape_cast %79 : vector<8xf32> to vector<8x1xf32>
    %cst_27 = arith.constant 3.200000e+01 : f32
    %81 = vector.broadcast %cst_27 : f32 to vector<8x1xf32>
    %82 = arith.divf %80, %81 : vector<8x1xf32>
    %83 = vector.broadcast %82 : vector<8x1xf32> to vector<8x32xf32>
    %84 = arith.subf %76, %83 : vector<8x32xf32>
    %85 = arith.mulf %84, %84 : vector<8x32xf32>
    %cst_28 = arith.constant dense<0.000000e+00> : vector<8xf32>
    %86 = vector.multi_reduction <add>, %85, %cst_28 [1] : vector<8x32xf32> to vector<8xf32>
    %87 = vector.shape_cast %86 : vector<8xf32> to vector<8x1xf32>
    %cst_29 = arith.constant 3.200000e+01 : f32
    %88 = vector.broadcast %cst_29 : f32 to vector<8x1xf32>
    %89 = arith.divf %87, %88 : vector<8x1xf32>
    %cst_30 = arith.constant 1.000000e-03 : f32
    %90 = vector.broadcast %cst_30 : f32 to vector<8x1xf32>
    %91 = arith.addf %89, %90 : vector<8x1xf32>
    %92 = math.rsqrt %91 : vector<8x1xf32>
    %93 = vector.broadcast %92 : vector<8x1xf32> to vector<8x32xf32>
    %94 = arith.mulf %84, %93 : vector<8x32xf32>
    %95 = vector.broadcast %77 : vector<1x32xf32> to vector<8x32xf32>
    %96 = arith.mulf %94, %95 : vector<8x32xf32>
    %97 = vector.broadcast %78 : vector<1x32xf32> to vector<8x32xf32>
    %98 = arith.addf %96, %97 : vector<8x32xf32>
    %99 = math.tanh %98 : vector<8x32xf32>
    %100 = arith.mulf %74, %99 : vector<8x32xf32>
    %cst_31 = arith.constant 1.000000e+00 : f32
    %101 = vector.broadcast %cst_31 : f32 to vector<8x32xf32>
    %102 = arith.subf %101, %74 : vector<8x32xf32>
    %103 = arith.mulf %102, %2 : vector<8x32xf32>
    %104 = arith.addf %100, %103 : vector<8x32xf32>
    %c0_32 = arith.constant 0 : index
    %c0_33 = arith.constant 0 : index
    %105 = vector.load %arg6[%c0_32, %c0_33] : memref<8x32xf32, #tpu.memory_space<vmem>>, vector<8x32xf32>
    tpu.vector_store %arg6[%c0_32, %c0_33], %104 {strides = array<i32>} : memref<8x32xf32, #tpu.memory_space<vmem>>, vector<8x32xf32>,
    return
  }
  func.func @transform_0(%arg0: i32) -> (i32, i32) {
    %c0_i32 = arith.constant 0 : i32
    %c0_i32_0 = arith.constant 0 : i32
    return %arg0, %c0_i32 : i32, i32
  }
  func.func @transform_1(%arg0: i32) -> (i32, i32) {
    %c0_i32 = arith.constant 0 : i32
    %c0_i32_0 = arith.constant 0 : i32
    return %arg0, %c0_i32 : i32, i32
  }
  func.func @transform_2(%arg0: i32) -> (i32, i32) {
    %c0_i32 = arith.constant 0 : i32
    %c0_i32_0 = arith.constant 0 : i32
    %c0_i32_1 = arith.constant 0 : i32
    return %c0_i32, %c0_i32_0 : i32, i32
  }
  func.func @transform_3(%arg0: i32) -> (i32, i32) {
    %c0_i32 = arith.constant 0 : i32
    %c0_i32_0 = arith.constant 0 : i32
    %c0_i32_1 = arith.constant 0 : i32
    return %c0_i32, %c0_i32_0 : i32, i32
  }
  func.func @transform_4(%arg0: i32) -> (i32, i32) {
    %c0_i32 = arith.constant 0 : i32
    %c0_i32_0 = arith.constant 0 : i32
    %c0_i32_1 = arith.constant 0 : i32
    return %c0_i32, %c0_i32_0 : i32, i32
  }
  func.func @transform_5(%arg0: i32) -> (i32, i32) {
    %c0_i32 = arith.constant 0 : i32
    %c0_i32_0 = arith.constant 0 : i32
    return %arg0, %c0_i32 : i32, i32
  }
}

</mosaic_0001>

<llo_original>
// kernel: tpu_custom_call.1
$region0: #{tpu_custom_call.1}
  #allocation0 [shape = 'u32[]', space=smem, size = 0x4, offset = 0x4, fixed_abs, tag = 'smem constant byte address 0x4 - core index']
  #allocation1 [shape = 'u32[144,128]{1,0:T(1,128)}', space=vmem, size = 0x12000, scoped, tag = 'internal scratch']
  %s0 = inlined_call_operand.hbm [shape: f32[16,16], index: 0, kind: input, shape index: {}]
  %s1 = inlined_call_operand.hbm [shape: f32[16,32], index: 1, kind: input, shape index: {}]
  %s2 = inlined_call_operand.hbm [shape: bf16[16,96], index: 2, kind: input, shape index: {}]
  %s3 = inlined_call_operand.hbm [shape: bf16[32,96], index: 3, kind: input, shape index: {}]
  %s4 = inlined_call_operand.vmem [shape: f32[6,32], index: 4, kind: input, shape index: {}]
  %s5 = inlined_call_operand.hbm [shape: f32[16,32], index: 5, kind: output, shape index: {}]
  %s6 = sld [smem:[#allocation0]]
  $region69: #{tpu_custom_call.1} parent=0
    _
  %s8 = ssub.s32 1, %s6
  %s9 = scalar_select 0, %s8, %s6
  $region1: #{tpu_custom_call.1} parent=0
    #allocation2 [shape = 'u8[8192]{0}', space=vmem, size = 0x2000, scoped, tag = 'input window, operand 0']
    #allocation3 [shape = 's32[2]{0}', space=sflag, size = 0x8, scoped, tag = 'scoped memory for tpu_custom_call.1']
    #allocation4 [shape = 's32[2]{0}', space=sflag, size = 0x8, scoped, tag = 'scoped memory for tpu_custom_call.1']
    #allocation5 [shape = 'u8[8192]{0}', space=vmem, size = 0x2000, scoped, tag = 'input window, operand 1']
    #allocation6 [shape = 's32[2]{0}', space=sflag, size = 0x8, scoped, tag = 'scoped memory for tpu_custom_call.1']
    #allocation7 [shape = 'u8[4096]{0}', space=vmem, size = 0x1000, scoped, tag = 'input window, operand 2, single buffered']
    #allocation8 [shape = 'u8[8192]{0}', space=vmem, size = 0x2000, scoped, tag = 'input window, operand 3, single buffered']
    #allocation9 [shape = 's32[1]{0}', space=sflag, size = 0x4, scoped, tag = 'scoped memory for tpu_custom_call.1']
    #allocation10 [shape = 'u8[8192]{0}', space=vmem, size = 0x2000, scoped, tag = 'output window, operand 0']
    %10 = vsyncpa [#allocation3], 0
    %s11 = scalar_lea.sflag [#allocation3], 1
    %12 = vsyncpa %s11, 0
    %13 = vsyncpa [#allocation6], 0
    %s14 = scalar_lea.sflag [#allocation6], 1
    %15 = vsyncpa %s14, 0
    %16 = vsyncpa [#allocation9], 0
    %17 = vsyncpa [#allocation4], 0
    %s18 = scalar_lea.sflag [#allocation4], 1
    %19 = vsyncpa %s18, 0
    loop: start=0, step=1, limit=4
    $region2: #{tpu_custom_call.1} parent=1 // loop_pre_header
      _
    $region3: #{tpu_custom_call.1} parent=1 // loop_header
      %s21 = sphi 0, %s25
      %p22 = scmp.ge.s32.totalorder %s21, 4
      %s31 = sphi 0, %s33
      %s34 = sphi 0, %s31
      %s35 = sphi 0, %s34
      %s51 = sphi 0, %s35
      %s57 = sphi 0, %s59
      %s60 = sphi 0, %s57
      %s61 = sphi 0, %s60
      %s77 = sphi 0, %s61
      %s81 = sphi 0, %s81
      %s83 = sphi 0, %s81
      %s84 = sphi 0, %s83
      %s98 = sphi 0, %s84
      %s102 = sphi 0, %s102
      %s104 = sphi 0, %s102
      %s105 = sphi 0, %s104
      %s119 = sphi 0, %s105
      %s123 = sphi 0, %s123
      %s125 = sphi 0, %s123
      %s126 = sphi 0, %s125
      %s140 = sphi 0, %s126
      %s146 = sphi 0, %s148
      %s149 = sphi 0, %s146
      %s150 = sphi 0, %s149
      %s166 = sphi 0, %s150
    $region4: #{tpu_custom_call.1} parent=1 // loop_header_branch
      %24 = sbr.rel (%p22) target = $region8
    $region5: #{tpu_custom_call.1} parent=1 // loop_body
      %s26 = ssub.s32 %s21, 1
      %s27 = ssub.s32 %s21, 2
      %s28 = sadd.s32 %s21, 1
      %s29 = ssub.s32 %s21, %s28
      %p30 = scmp.eq.s32.totalorder %s29, 0
      %s32 = sadd.s32 %s31, 1
      %s33 = scalar_select %p30, %s31, %s32
      %p36 = pneg %p30
      %p37 = scmp.eq.s32.totalorder %s21, 1
      %p38 = por %p36, %p37
      %p39 = scmp.ne.s32.totalorder %s31, %s34
      %p40 = scmp.eq.s32.totalorder %s21, 0
      %p41 = por %p39, %p40
      %p42 = scmp.ne.s32.totalorder %s31, %s34
      %p43 = scmp.eq.s32.totalorder %s26, 1
      %p44 = por %p42, %p43
      %p45 = scmp.ne.s32.totalorder %s34, %s35
      %p46 = scmp.eq.s32.totalorder %s26, 0
      %p47 = por %p45, %p46
      %p48 = scmp.ne.s32.totalorder %s34, %s35
      %p49 = scmp.eq.s32.totalorder %s27, 1
      %p50 = por %p48, %p49
      %p52 = scmp.ne.s32.totalorder %s35, %s51
      %p53 = scmp.eq.s32.totalorder %s27, 0
      %p54 = por %p52, %p53
      %s55 = ssub.s32 %s21, %s28
      %p56 = scmp.eq.s32.totalorder %s55, 0
      %s58 = sadd.s32 %s57, 1
      %s59 = scalar_select %p56, %s57, %s58
      %p62 = pneg %p56
      %p63 = scmp.eq.s32.totalorder %s21, 1
      %p64 = por %p62, %p63
      %p65 = scmp.ne.s32.totalorder %s57, %s60
      %p66 = scmp.eq.s32.totalorder %s21, 0
      %p67 = por %p65, %p66
      %p68 = scmp.ne.s32.totalorder %s57, %s60
      %p69 = scmp.eq.s32.totalorder %s26, 1
      %p70 = por %p68, %p69
      %p71 = scmp.ne.s32.totalorder %s60, %s61
      %p72 = scmp.eq.s32.totalorder %s26, 0
      %p73 = por %p71, %p72
      %p74 = scmp.ne.s32.totalorder %s60, %s61
      %p75 = scmp.eq.s32.totalorder %s27, 1
      %p76 = por %p74, %p75
      %p78 = scmp.ne.s32.totalorder %s61, %s77
      %p79 = scmp.eq.s32.totalorder %s27, 0
      %p80 = por %p78, %p79
      %s82 = sadd.s32 %s81, 1
      %p85 = scmp.eq.s32.totalorder %s21, 1
      %p86 = scmp.ne.s32.totalorder %s81, %s83
      %p87 = scmp.eq.s32.totalorder %s21, 0
      %p88 = por %p86, %p87
      %p89 = scmp.ne.s32.totalorder %s81, %s83
      %p90 = scmp.eq.s32.totalorder %s26, 1
      %p91 = por %p89, %p90
      %p92 = scmp.ne.s32.totalorder %s83, %s84
      %p93 = scmp.eq.s32.totalorder %s26, 0
      %p94 = por %p92, %p93
      %p95 = scmp.ne.s32.totalorder %s83, %s84
      %p96 = scmp.eq.s32.totalorder %s27, 1
      %p97 = por %p95, %p96
      %p99 = scmp.ne.s32.totalorder %s84, %s98
      %p100 = scmp.eq.s32.totalorder %s27, 0
      %p101 = por %p99, %p100
      %s103 = sadd.s32 %s102, 1
      %p106 = scmp.eq.s32.totalorder %s21, 1
      %p107 = scmp.ne.s32.totalorder %s102, %s104
      %p108 = scmp.eq.s32.totalorder %s21, 0
      %p109 = por %p107, %p108
      %p110 = scmp.ne.s32.totalorder %s102, %s104
      %p111 = scmp.eq.s32.totalorder %s26, 1
      %p112 = por %p110, %p111
      %p113 = scmp.ne.s32.totalorder %s104, %s105
      %p114 = scmp.eq.s32.totalorder %s26, 0
      %p115 = por %p113, %p114
      %p116 = scmp.ne.s32.totalorder %s104, %s105
      %p117 = scmp.eq.s32.totalorder %s27, 1
      %p118 = por %p116, %p117
      %p120 = scmp.ne.s32.totalorder %s105, %s119
      %p121 = scmp.eq.s32.totalorder %s27, 0
      %p122 = por %p120, %p121
      %s124 = sadd.s32 %s123, 1
      %p127 = scmp.eq.s32.totalorder %s21, 1
      %p128 = scmp.ne.s32.totalorder %s123, %s125
      %p129 = scmp.eq.s32.totalorder %s21, 0
      %p130 = por %p128, %p129
      %p131 = scmp.ne.s32.totalorder %s123, %s125
      %p132 = scmp.eq.s32.totalorder %s26, 1
      %p133 = por %p131, %p132
      %p134 = scmp.ne.s32.totalorder %s125, %s126
      %p135 = scmp.eq.s32.totalorder %s26, 0
      %p136 = por %p134, %p135
      %p137 = scmp.ne.s32.totalorder %s125, %s126
      %p138 = scmp.eq.s32.totalorder %s27, 1
      %p139 = por %p137, %p138
      %p141 = scmp.ne.s32.totalorder %s126, %s140
      %p142 = scmp.eq.s32.totalorder %s27, 0
      %p143 = por %p141, %p142
      %s144 = ssub.s32 %s21, %s28
      %p145 = scmp.eq.s32.totalorder %s144, 0
      %s147 = sadd.s32 %s146, 1
      %s148 = scalar_select %p145, %s146, %s147
      %p151 = pneg %p145
      %p152 = scmp.eq.s32.totalorder %s21, 1
      %p153 = por %p151, %p152
      %p154 = scmp.ne.s32.totalorder %s146, %s149
      %p155 = scmp.eq.s32.totalorder %s21, 0
      %p156 = por %p154, %p155
      %p157 = scmp.ne.s32.totalorder %s146, %s149
      %p158 = scmp.eq.s32.totalorder %s26, 1
      %p159 = por %p157, %p158
      %p160 = scmp.ne.s32.totalorder %s149, %s150
      %p161 = scmp.eq.s32.totalorder %s26, 0
      %p162 = por %p160, %p161
      %p163 = scmp.ne.s32.totalorder %s149, %s150
      %p164 = scmp.eq.s32.totalorder %s27, 1
      %p165 = por %p163, %p164
      %p167 = scmp.ne.s32.totalorder %s150, %s166
      %p168 = scmp.eq.s32.totalorder %s27, 0
      %p169 = por %p167, %p168
      %p170 = scmp.le.s32.totalorder 1, %s21
      %p171 = scmp.lt.s32.totalorder %s21, 3
      %p172 = pnand %p170, %p171
      %p173 = pneg %p172
      // Predicated region
      $region9: #{tpu_custom_call.1} parent=5 // pred_check
        _
      $region10: #{tpu_custom_call.1} parent=5 // pred_check_branch
        %175 = sbr.rel (%p172) target = $region12
      $region11: #{tpu_custom_call.1} parent=5 // pred_region
        %s176 = ssub.s32 %s21, 1
        // Predicated region
        $region13: #{tpu_custom_call.1} parent=11 // pred_check
          %p177 = pneg %p94
        $region14: #{tpu_custom_call.1} parent=11 // pred_check_branch
          %179 = sbr.rel (%p177) target = $region16
        $region15: #{tpu_custom_call.1} parent=11 // pred_region
          %s181 = ssub.s32 128, 128
          %182 = vsyncadd [#allocation6], %s181
          %s183 = sshll.u32 [#allocation7], 4
          %s184 = int_to_ptr.vmem [resolvable:$true] %s183
          %189 = dma.hbm_to_vmem [thread:$0]  %s2, 128, %s184, [#allocation6], 64, 64, 4
        $region16: #{tpu_custom_call.1} parent=11 // pred_fallthru
          _
        // Predicated region
        $region17: #{tpu_custom_call.1} parent=11 // pred_check
          %p190 = pneg %p115
        $region18: #{tpu_custom_call.1} parent=11 // pred_check_branch
          %192 = sbr.rel (%p190) target = $region20
        $region19: #{tpu_custom_call.1} parent=11 // pred_region
          %s194 = ssub.s32 256, 256
          %195 = vsyncadd [#allocation9], %s194
          %s196 = sshll.u32 [#allocation8], 4
          %s197 = int_to_ptr.vmem [resolvable:$true] %s196
          %202 = dma.hbm_to_vmem [thread:$0]  %s3, 256, %s197, [#allocation9], 64, 64, 4
        $region20: #{tpu_custom_call.1} parent=11 // pred_fallthru
          _
        // Predicated region
        $region21: #{tpu_custom_call.1} parent=11 // pred_check
          %p203 = pneg %p136
        $region22: #{tpu_custom_call.1} parent=11 // pred_check_branch
          %205 = sbr.rel (%p203) target = $region24
        $region23: #{tpu_custom_call.1} parent=11 // pred_region
          _
        $region24: #{tpu_custom_call.1} parent=11 // pred_fallthru
          _
      $region12: #{tpu_custom_call.1} parent=5 // pred_fallthru
        _
      %p206 = scmp.lt.s32.totalorder %s21, 2
      // Predicated region
      $region25: #{tpu_custom_call.1} parent=5 // pred_check
        %p207 = pneg %p206
      $region26: #{tpu_custom_call.1} parent=5 // pred_check_branch
        %209 = sbr.rel (%p207) target = $region28
      $region27: #{tpu_custom_call.1} parent=5 // pred_region
        // Predicated region
        $region29: #{tpu_custom_call.1} parent=27 // pred_check
          %p210 = pneg %p41
        $region30: #{tpu_custom_call.1} parent=27 // pred_check_branch
          %212 = sbr.rel (%p210) target = $region32
        $region31: #{tpu_custom_call.1} parent=27 // pred_region
          %s213 = sand.u32 %s31, 1
          %s214 = scalar_lea.sflag [#allocation3], %s213
          %s215 = sand.u32 %s31, 1
          %s216 = smul.addr %s215, 8
          %s217 = scalar_lea.vmem [#allocation2], %s216
          %s219 = ssub.s32 128, 128
          %220 = vsyncadd %s214, %s219
          %s221 = smul.addr %s21, 128
          %s222 = scalar_lea.hbm %s0, %s221
          %s224 = sshll.u32 %s217, 4
          %s225 = int_to_ptr.vmem [resolvable:$true] %s224
          %227 = dma.hbm_to_vmem [thread:$0]  %s222, 128, %s225, %s214
        $region32: #{tpu_custom_call.1} parent=27 // pred_fallthru
          _
        // Predicated region
        $region33: #{tpu_custom_call.1} parent=27 // pred_check
          %p228 = pneg %p67
        $region34: #{tpu_custom_call.1} parent=27 // pred_check_branch
          %230 = sbr.rel (%p228) target = $region36
        $region35: #{tpu_custom_call.1} parent=27 // pred_region
          %s231 = sand.u32 %s21, 1
          %s232 = scalar_lea.sflag [#allocation6], %s231
          %s233 = sand.u32 %s57, 1
          %s234 = smul.addr %s233, 8
          %s235 = scalar_lea.vmem [#allocation5], %s234
          %s237 = ssub.s32 128, 128
          %238 = vsyncadd %s232, %s237
          %s239 = smul.addr %s21, 128
          %s240 = scalar_lea.hbm %s1, %s239
          %s242 = sshll.u32 %s235, 4
          %s243 = int_to_ptr.vmem [resolvable:$true] %s242
          %245 = dma.hbm_to_vmem [thread:$0]  %s240, 128, %s243, %s232
        $region36: #{tpu_custom_call.1} parent=27 // pred_fallthru
          _
      $region28: #{tpu_custom_call.1} parent=5 // pred_fallthru
        _
      %p246 = scmp.le.s32.totalorder 1, %s21
      %p247 = scmp.lt.s32.totalorder %s21, 3
      %p248 = pnand %p246, %p247
      %p249 = pneg %p248
      // Predicated region
      $region37: #{tpu_custom_call.1} parent=5 // pred_check
        _
      $region38: #{tpu_custom_call.1} parent=5 // pred_check_branch
        %251 = sbr.rel (%p248) target = $region40
      $region39: #{tpu_custom_call.1} parent=5 // pred_region
        %s252 = ssub.s32 %s21, 1
        %s253 = sand.u32 %s34, 1
        %s254 = scalar_lea.sflag [#allocation3], %s253
        %s255 = sand.u32 %s34, 1
        %s256 = smul.addr %s255, 8
        %s257 = scalar_lea.vmem [#allocation2], %s256
        // Predicated region
        $region41: #{tpu_custom_call.1} parent=39 // pred_check
          %p258 = pneg %p47
        $region42: #{tpu_custom_call.1} parent=39 // pred_check_branch
          %260 = sbr.rel (%p258) target = $region44
        $region43: #{tpu_custom_call.1} parent=39 // pred_region
          %261 = dma.done %s254, 128
        $region44: #{tpu_custom_call.1} parent=39 // pred_fallthru
          _
        %s262 = sand.u32 %s26, 1
        %s263 = scalar_lea.sflag [#allocation6], %s262
        %s264 = sand.u32 %s60, 1
        %s265 = smul.addr %s264, 8
        %s266 = scalar_lea.vmem [#allocation5], %s265
        // Predicated region
        $region45: #{tpu_custom_call.1} parent=39 // pred_check
          %p267 = pneg %p73
        $region46: #{tpu_custom_call.1} parent=39 // pred_check_branch
          %269 = sbr.rel (%p267) target = $region48
        $region47: #{tpu_custom_call.1} parent=39 // pred_region
          %270 = dma.done %s263, 128
        $region48: #{tpu_custom_call.1} parent=39 // pred_fallthru
          _
        // Predicated region
        $region49: #{tpu_custom_call.1} parent=39 // pred_check
          %p271 = pneg %p94
        $region50: #{tpu_custom_call.1} parent=39 // pred_check_branch
          %273 = sbr.rel (%p271) target = $region52
        $region51: #{tpu_custom_call.1} parent=39 // pred_region
          %274 = dma.done [#allocation6], 128
        $region52: #{tpu_custom_call.1} parent=39 // pred_fallthru
          _
        // Predicated region
        $region53: #{tpu_custom_call.1} parent=39 // pred_check
          %p275 = pneg %p115
        $region54: #{tpu_custom_call.1} parent=39 // pred_check_branch
          %277 = sbr.rel (%p275) target = $region56
        $region55: #{tpu_custom_call.1} parent=39 // pred_region
          %278 = dma.done [#allocation9], 256
        $region56: #{tpu_custom_call.1} parent=39 // pred_fallthru
          _
        %s279 = sand.u32 %s34, 1
        %s280 = scalar_lea.sflag [#allocation3], %s279
        %s281 = sand.u32 %s34, 1
        %s282 = smul.addr %s281, 8
        %s283 = scalar_lea.vmem [#allocation2], %s282
        %p284 = pneg %p47
        %p285 = pneg %p44
        %s286 = sand.u32 %s26, 1
        %s287 = scalar_lea.sflag [#allocation6], %s286
        %s288 = sand.u32 %s60, 1
        %s289 = smul.addr %s288, 8
        %s290 = scalar_lea.vmem [#allocation5], %s289
        %p291 = pneg %p73
        %p292 = pneg %p70
        %p293 = pneg %p94
        %p294 = pneg %p91
        %p295 = pneg %p115
        %p296 = pneg %p112
        %p297 = pneg %p136
        %p298 = pneg %p133
        %p299 = pneg %p162
        %p300 = pneg %p159
        %s301 = sand.u32 %s149, 1
        %s302 = scalar_lea.sflag [#allocation4], %s301
        %s303 = sand.u32 %s149, 1
        %s304 = smul.addr %s303, 8
        %s305 = scalar_lea.vmem [#allocation10], %s304
        %v307 = vld [vmem:[%s257] sm:$0xff]
        %v308 = vpack.c.bf16 %v307, %v307
        %v309 = vld [vmem:[%s266] sm:$0xff]
        %v310 = vpack.c.bf16 %v309, %v309
        %v311 = vld [vmem:[#allocation7] sm:$0xf]
        %v312 = vld [vmem:[#allocation7 + $0x4] sm:$0xf]
        %v315 = vunpack.c.l.b16 %v311
        %v316 = vunpack.c.l.b16 %v312
        %v317 = vpack.c.b16 %v316, %v315
        %vm319 = vcmask 130048
        %v321 = vsel %vm319, %v308, 0
        %323 = vmatprep.subr.bf16.mxu0 0
        %324 = vmatpush1.bf16.msra.mxu0 %v317
        %325 = vmatprep.subr.bf16.mxu0 0
        %326 = vmatpush1.bf16.msra.mxu0 0
        %327 = vmatprep.subr.bf16.mxu0 0
        %328 = vmatpush1.bf16.msra.mxu0 0
        %329 = vmatprep.subr.bf16.mxu0 0
        %330 = vmatpush1.bf16.msra.mxu0 0
        %331 = vmatprep.subr.bf16.mxu0 0
        %332 = vmatpush1.bf16.msra.mxu0 0
        %333 = vmatprep.subr.bf16.mxu0 0
        %334 = vmatpush1.bf16.msra.mxu0 0
        %335 = vmatprep.subr.bf16.mxu0 0
        %336 = vmatpush1.bf16.msra.mxu0 0
        %337 = vmatprep.subr.bf16.mxu0 0
        %338 = vmatpush1.bf16.msra.mxu0 0
        %339 = vmatprep.subr.bf16.mxu0 0
        %340 = vmatpush1.bf16.msra.mxu0 0
        %341 = vmatprep.subr.bf16.mxu0 0
        %342 = vmatpush1.bf16.msra.mxu0 0
        %343 = vmatprep.subr.bf16.mxu0 0
        %344 = vmatpush1.bf16.msra.mxu0 0
        %345 = vmatprep.subr.bf16.mxu0 0
        %346 = vmatpush1.bf16.msra.mxu0 0
        %347 = vmatprep.subr.bf16.mxu0 0
        %348 = vmatpush1.bf16.msra.mxu0 0
        %349 = vmatprep.subr.bf16.mxu0 0
        %350 = vmatpush1.bf16.msra.mxu0 0
        %351 = vmatprep.subr.bf16.mxu0 0
        %352 = vmatpush1.bf16.msra.mxu0 0
        %353 = vmatprep.subr.bf16.mxu0 0
        %354 = vmatpush1.bf16.msra.mxu0 0
        %355 = vmatprep.mubr.bf16.mxu0 0
        %356 = vmatmul.mubr.bf16.gmra.mrb[0].mxu0 %v321
        %v357 = vpop.f32.mrb[0].mxu0
        %v358 = vadd.f32 0.0, %v357
        %v359 = vpop.f32.mrb[0].mxu0
        %v360 = vpop.f32.mrb[0].mxu0
        %v361 = vpop.f32.mrb[0].mxu0
        %362 = vdwg.mxu0
        %v363 = vld [vmem:[#allocation8] sm:$0xf]
        %v364 = vld [vmem:[#allocation8 + $0x4] sm:$0xf]
        %v365 = vld [vmem:[#allocation8 + $0x8] sm:$0xf]
        %v366 = vld [vmem:[#allocation8 + $0xc] sm:$0xf]
        %v371 = vunpack.c.l.b16 %v363
        %v372 = vunpack.c.l.b16 %v364
        %v373 = vunpack.c.l.b16 %v365
        %v374 = vunpack.c.l.b16 %v366
        %v375 = vpack.c.b16 %v372, %v371
        %v376 = vpack.c.b16 %v374, %v373
        %vm379 = vcmask 261120
        %v381 = vsel %vm379, %v310, 0
        %383 = vmatprep.subr.bf16.mxu0 0
        %384 = vmatpush1.bf16.msra.mxu0 %v375
        %385 = vmatprep.subr.bf16.mxu0 0
        %386 = vmatpush1.bf16.msra.mxu0 %v376
        %387 = vmatprep.subr.bf16.mxu0 0
        %388 = vmatpush1.bf16.msra.mxu0 0
        %389 = vmatprep.subr.bf16.mxu0 0
        %390 = vmatpush1.bf16.msra.mxu0 0
        %391 = vmatprep.subr.bf16.mxu0 0
        %392 = vmatpush1.bf16.msra.mxu0 0
        %393 = vmatprep.subr.bf16.mxu0 0
        %394 = vmatpush1.bf16.msra.mxu0 0
        %395 = vmatprep.subr.bf16.mxu0 0
        %396 = vmatpush1.bf16.msra.mxu0 0
        %397 = vmatprep.subr.bf16.mxu0 0
        %398 = vmatpush1.bf16.msra.mxu0 0
        %399 = vmatprep.subr.bf16.mxu0 0
        %400 = vmatpush1.bf16.msra.mxu0 0
        %401 = vmatprep.subr.bf16.mxu0 0
        %402 = vmatpush1.bf16.msra.mxu0 0
        %403 = vmatprep.subr.bf16.mxu0 0
        %404 = vmatpush1.bf16.msra.mxu0 0
        %405 = vmatprep.subr.bf16.mxu0 0
        %406 = vmatpush1.bf16.msra.mxu0 0
        %407 = vmatprep.subr.bf16.mxu0 0
        %408 = vmatpush1.bf16.msra.mxu0 0
        %409 = vmatprep.subr.bf16.mxu0 0
        %410 = vmatpush1.bf16.msra.mxu0 0
        %411 = vmatprep.subr.bf16.mxu0 0
        %412 = vmatpush1.bf16.msra.mxu0 0
        %413 = vmatprep.subr.bf16.mxu0 0
        %414 = vmatpush1.bf16.msra.mxu0 0
        %415 = vmatprep.mubr.bf16.mxu0 0
        %416 = vmatmul.mubr.bf16.gmra.mrb[0].mxu0 %v381
        %v417 = vpop.f32.mrb[0].mxu0
        %v418 = vadd.f32 0.0, %v417
        %v419 = vpop.f32.mrb[0].mxu0
        %v420 = vpop.f32.mrb[0].mxu0
        %v421 = vpop.f32.mrb[0].mxu0
        %422 = vdwg.mxu0
        %v423 = vld [vmem:[%s4] sm:$0x3f]
        %v424 = vadd.f32 %v358, %v418
        %v425 = vsel %vm379, %v424, 0.0
        %426 = vadd.xlane.f32.xlu0 %v425
        %v427 = vpop.xlane.xlu0 %426
        %v428 = vrcp.pop 32.0
        %v429 = vmul.f32 %v427, %v428
        %v430 = vsub.f32 %v424, %v429
        %v431 = vmul.f32 %v430, %v430
        %v432 = vsel %vm379, %v431, 0.0
        %433 = vadd.xlane.f32.xlu0 %v432
        %v434 = vpop.xlane.xlu0 %433
        %v435 = vmul.f32 %v434, %v428
        %v436 = vadd.f32 %v435, 0.001
        %v437 = vrsqrt.pop %v436
        %v438 = vmul.f32 %v430, %v437
        %v439 = vlaneseq
        %v440 = vshrl.u32 %v439, 7
        %v441 = vsub.s32 0, %v440
        %v442 = vrot.slane %v423, %v441
        %v443 = vmul.f32 %v438, %v442
        %v444 = vlaneseq
        %v445 = vshrl.u32 %v444, 7
        %v446 = vsub.s32 1, %v445
        %v447 = vrot.slane %v423, %v446
        %v448 = vadd.f32 %v443, %v447
        %v449 = vmul.f32 %v448, 0.5
        %v450 = vtanh.pop %v449
        %v451 = vmul.f32 %v450, 0.5
        %v452 = vadd.f32 %v451, 0.5
        %454 = vrot.lane.b32.xlu0 %v424, 96
        %v455 = vpop.permute.xlu0 %454
        %v457 = vsel %vm379, %v455, 0.0
        %458 = vadd.xlane.f32.xlu0 %v457
        %v459 = vpop.xlane.xlu0 %458
        %v460 = vmul.f32 %v459, %v428
        %v461 = vsub.f32 %v424, %v460
        %v462 = vmul.f32 %v461, %v461
        %464 = vrot.lane.b32.xlu0 %v462, 96
        %v465 = vpop.permute.xlu0 %464
        %v467 = vsel %vm379, %v465, 0.0
        %468 = vadd.xlane.f32.xlu0 %v467
        %v469 = vpop.xlane.xlu0 %468
        %v470 = vmul.f32 %v469, %v428
        %v471 = vadd.f32 %v470, 0.001
        %v472 = vrsqrt.pop %v471
        %v473 = vmul.f32 %v461, %v472
        %v474 = vlaneseq
        %v475 = vshrl.u32 %v474, 7
        %v476 = vsub.s32 2, %v475
        %v477 = vrot.slane %v423, %v476
        %479 = vrot.lane.b32.xlu0 %v477, 32
        %v480 = vpop.permute.xlu0 %479
        %v482 = vmul.f32 %v473, %v480
        %v483 = vlaneseq
        %v484 = vshrl.u32 %v483, 7
        %v485 = vsub.s32 3, %v484
        %v486 = vrot.slane %v423, %v485
        %488 = vrot.lane.b32.xlu0 %v486, 32
        %v489 = vpop.permute.xlu0 %488
        %v491 = vadd.f32 %v482, %v489
        %v492 = vmul.f32 %v491, 0.5
        %v493 = vtanh.pop %v492
        %v494 = vmul.f32 %v493, 0.5
        %v495 = vadd.f32 %v494, 0.5
        %497 = vrot.lane.b32.xlu0 %v418, 64
        %v498 = vpop.permute.xlu0 %497
        %v500 = vmul.f32 %v452, %v498
        %502 = vrot.lane.b32.xlu0 %v500, 64
        %v503 = vpop.permute.xlu0 %502
        %v505 = vadd.f32 %v358, %v503
        %507 = vrot.lane.b32.xlu0 %v505, 64
        %v508 = vpop.permute.xlu0 %507
        %v510 = vsel %vm379, %v508, 0.0
        %511 = vadd.xlane.f32.xlu0 %v510
        %v512 = vpop.xlane.xlu0 %511
        %v513 = vmul.f32 %v512, %v428
        %v514 = vsub.f32 %v505, %v513
        %v515 = vmul.f32 %v514, %v514
        %517 = vrot.lane.b32.xlu0 %v515, 64
        %v518 = vpop.permute.xlu0 %517
        %v520 = vsel %vm379, %v518, 0.0
        %521 = vadd.xlane.f32.xlu0 %v520
        %v522 = vpop.xlane.xlu0 %521
        %v523 = vmul.f32 %v522, %v428
        %v524 = vadd.f32 %v523, 0.001
        %v525 = vrsqrt.pop %v524
        %v526 = vmul.f32 %v514, %v525
        %v527 = vlaneseq
        %v528 = vshrl.u32 %v527, 7
        %v529 = vsub.s32 4, %v528
        %v530 = vrot.slane %v423, %v529
        %532 = vrot.lane.b32.xlu0 %v530, 64
        %v533 = vpop.permute.xlu0 %532
        %v535 = vmul.f32 %v526, %v533
        %v536 = vlaneseq
        %v537 = vshrl.u32 %v536, 7
        %v538 = vsub.s32 5, %v537
        %v539 = vrot.slane %v423, %v538
        %541 = vrot.lane.b32.xlu0 %v539, 64
        %v542 = vpop.permute.xlu0 %541
        %v544 = vadd.f32 %v535, %v542
        %v545 = vtanh.pop %v544
        %547 = vrot.lane.b32.xlu0 %v545, 96
        %v548 = vpop.permute.xlu0 %547
        %v550 = vmul.f32 %v495, %v548
        %v551 = vsub.f32 1.0, %v495
        %553 = vrot.lane.b32.xlu0 %v309, 32
        %v554 = vpop.permute.xlu0 %553
        %v556 = vmul.f32 %v551, %v554
        %v557 = vadd.f32 %v550, %v556
        %559 = vrot.lane.b32.xlu0 %v557, 96
        %v560 = vpop.permute.xlu0 %559
        %562 = vst.msk [vmem:[%s305] sm:$0xff] %vm379, %v560
        %s563 = sand.u32 %s149, 1
        %s564 = scalar_lea.sflag [#allocation4], %s563
        %s565 = sand.u32 %s149, 1
        %s566 = smul.addr %s565, 8
        %s567 = scalar_lea.vmem [#allocation10], %s566
        // Predicated region
        $region57: #{tpu_custom_call.1} parent=39 // pred_check
          %p568 = pneg %p159
        $region58: #{tpu_custom_call.1} parent=39 // pred_check_branch
          %570 = sbr.rel (%p568) target = $region60
        $region59: #{tpu_custom_call.1} parent=39 // pred_region
          %s572 = ssub.s32 128, 128
          %573 = vsyncadd %s564, %s572
          %s574 = smul.addr %s26, 128
          %s575 = scalar_lea.hbm %s5, %s574
          %s577 = sshll.u32 %s567, 4
          %s578 = int_to_ptr.vmem [resolvable:$true] %s577
          %580 = dma.vmem_to_hbm [thread:$0]  %s578, 128, %s575, %s564
        $region60: #{tpu_custom_call.1} parent=39 // pred_fallthru
          _
      $region40: #{tpu_custom_call.1} parent=5 // pred_fallthru
        _
      %p581 = scmp.le.s32.totalorder 2, %s21
      // Predicated region
      $region61: #{tpu_custom_call.1} parent=5 // pred_check
        %p582 = pneg %p581
      $region62: #{tpu_custom_call.1} parent=5 // pred_check_branch
        %584 = sbr.rel (%p582) target = $region64
      $region63: #{tpu_custom_call.1} parent=5 // pred_region
        %s585 = ssub.s32 %s21, 2
        // Predicated region
        $region65: #{tpu_custom_call.1} parent=63 // pred_check
          %p586 = pneg %p165
        $region66: #{tpu_custom_call.1} parent=63 // pred_check_branch
          %588 = sbr.rel (%p586) target = $region68
        $region67: #{tpu_custom_call.1} parent=63 // pred_region
          %s589 = sand.u32 %s150, 1
          %s590 = scalar_lea.sflag [#allocation4], %s589
          %s591 = sand.u32 %s150, 1
          %s592 = smul.addr %s591, 8
          %s593 = scalar_lea.vmem [#allocation10], %s592
          %594 = dma.done %s590, 128
        $region68: #{tpu_custom_call.1} parent=63 // pred_fallthru
          _
      $region64: #{tpu_custom_call.1} parent=5 // pred_fallthru
        _
    $region6: #{tpu_custom_call.1} parent=1 // loop_footer
      %s25 = sadd.s32 1, %s21
    $region7: #{tpu_custom_call.1} parent=1 // loop_footer_branch
      %20 = sbr.rel target = $region3
    $region8: #{tpu_custom_call.1} parent=1 // loop_exit
      _
    %595 = vsyncpa [#allocation3], 1
    %s596 = scalar_lea.sflag [#allocation3], 1
    %597 = vsyncpa %s596, 1
    %598 = vsyncpa [#allocation6], 1
    %s599 = scalar_lea.sflag [#allocation6], 1
    %600 = vsyncpa %s599, 1
    %601 = vsyncpa [#allocation9], 1
    %602 = vsyncpa [#allocation4], 1
    %s603 = scalar_lea.sflag [#allocation4], 1
    %604 = vsyncpa %s603, 1

</llo_original>
